<compile_context>
chip_gen: v5e
topology: v5e:2x2
jax: 0.10.0
libtpu: 0.0.40
codegen_flags: <defaults>
</compile_context>

<pallas_src>
import functools

import numpy as np

import jax
import jax.numpy as jnp
from jax.experimental import pallas as pl
from jax.experimental.pallas import tpu as pltpu


def attention_kernel(x_ref, mrow_ref, mcol_ref, gamma_ref, beta_ref,
                     wqkv_ref, wo_ref, bout_ref, o_ref,
                     *, heads, dim_head, ln_eps):
    inner = heads * dim_head

    # ---- LayerNorm in f32, output cached as bf16 MXU operand ----
    x = x_ref[0]                                              # (N, D) f32
    mu = jnp.mean(x, axis=-1, keepdims=True)
    var = jnp.mean((x - mu) ** 2, axis=-1, keepdims=True)
    xn = (x - mu) * jax.lax.rsqrt(var + ln_eps)
    xn = (xn * gamma_ref[...] + beta_ref[...]).astype(jnp.bfloat16)

    # ---- fused QKV: one lane-dense matmul; softmax scale already folded
    #      into the q-columns of wqkv in the wrapper ----
    qkv = jnp.dot(xn, wqkv_ref[...], preferred_element_type=jnp.float32)
    qkv = qkv.astype(jnp.bfloat16)                            # (N, 3*inner)

    # ---- additive pair-mask bias, built once per batch (no transpose:
    #      mask passed in both (N,1) and (1,N) layouts).  Keep f32: -FMAX
    #      absorbs finite scores exactly (== masked_fill); never use -inf. ----
    mask_value = -jnp.finfo(jnp.float32).max
    pair = (mcol_ref[0] * mrow_ref[0]) > 0.5                  # (N,1)*(1,N) -> (N,N)
    bias = jnp.where(pair, 0.0, mask_value)                   # (N, N) f32

    # ---- per-head scores / softmax / PV (static unroll, static lane slices) ----
    outs = []
    for h in range(heads):
        q = qkv[:, h * dim_head:(h + 1) * dim_head]                       # (N, dh) bf16
        k = qkv[:, inner + h * dim_head:inner + (h + 1) * dim_head]       # (N, dh) bf16
        v = qkv[:, 2 * inner + h * dim_head:2 * inner + (h + 1) * dim_head]

        # scores: contract over dim_head without an explicit transpose of k
        dots = jax.lax.dot_general(
            q, k, (((1,), (1,)), ((), ())),
            preferred_element_type=jnp.float32)                           # (N, N) f32
        dots = dots + bias

        # softmax in f32 (matches torch.nn.Softmax(dim=-1)); reciprocal on the
        # EUP.  approx=True introduces ~1e-3..1e-2 rel error on the (N,1)
        # denominator; switch to approx=False if production accuracy demands.
        dmax = jnp.max(dots, axis=-1, keepdims=True)
        e = jnp.exp(dots - dmax)
        attn = e * pl.reciprocal(jnp.sum(e, axis=-1, keepdims=True), approx=True)

        out_h = jnp.dot(attn.astype(jnp.bfloat16), v,
                        preferred_element_type=jnp.float32)               # (N, dh) f32
        outs.append(out_h.astype(jnp.bfloat16))

    # ---- single K=inner output projection (lane-dense slab, head-major
    #      column order matches torch's 'b h n d -> b n (h d)') ----
    out_cat = jnp.concatenate(outs, axis=-1)                              # (N, inner) bf16
    o_ref[0] = (jnp.dot(out_cat, wo_ref[...],
                        preferred_element_type=jnp.float32)
                + bout_ref[...])                                          # (N, D) f32


def _vmem_limit_bytes(n_pad, d, inner):
    """Rough per-grid-step footprint with 2x headroom, clamped to a range
    that is valid on every chip (v5e/v6e: 128 MiB, v7x: 64 MiB physical)."""
    f32, bf16 = 4, 2
    io = 2 * 2 * (n_pad * d * f32)                      # x + out blocks, double-buffered
    msk = 2 * 2 * (n_pad * f32)                         # row/col mask blocks
    wts = (d * 3 * inner + inner * d) * bf16 + 3 * d * f32
    tmp = (3 * n_pad * n_pad * f32                      # bias / dots / e
           + n_pad * 3 * inner * (f32 + bf16)           # qkv f32 + bf16
           + 2 * n_pad * inner * bf16                   # head outputs + concat slab
           + 2 * n_pad * d * f32)                       # xn / final
    est = io + msk + wts + tmp
    return int(min(max(2 * est, 16 * 1024 * 1024), 64 * 1024 * 1024))


def attention_forward(x, mask, params, *, heads, dim_head):
    """Returns (out, mask, sampled_token_ids) like the PyTorch module."""
    B, N, D = x.shape
    inner = heads * dim_head
    scale = dim_head ** -0.5

    # ---- wrapper-side layout plumbing (cheap one-time XLA ops) ----
    # Pad tokens to a sublane multiple; padded tokens are masked out and
    # cropped from the output.  TODO(synk): pad to 128 for production N.
    N_pad = ((N + 7) // 8) * 8
    if N_pad != N:
        x_p = jnp.pad(x, ((0, 0), (0, N_pad - N), (0, 0)))
        mask_p = jnp.pad(mask, ((0, 0), (0, N_pad - N)), constant_values=False)
    else:
        x_p, mask_p = x, mask

    # Fold the softmax scale into the q-columns of w_qkv (q = xn @ (Wq*scale)),
    # then cast weights to bf16 MXU operands.
    w_qkv = params["w_qkv"]
    w_qkv = jnp.concatenate([w_qkv[:, :inner] * scale, w_qkv[:, inner:]], axis=1)
    w_qkv = w_qkv.astype(jnp.bfloat16)                       # (D, 3*inner)
    w_out = params["w_out"].astype(jnp.bfloat16)              # (inner, D)

    # Mask passed in both row and column layouts -> no in-kernel transpose.
    mask_row = mask_p.astype(jnp.float32).reshape(B, 1, N_pad)
    mask_col = mask_p.astype(jnp.float32).reshape(B, N_pad, 1)

    kernel = functools.partial(attention_kernel, heads=heads,
                               dim_head=dim_head, ln_eps=1e-5)

    out = pl.pallas_call(
        kernel,
        out_shape=jax.ShapeDtypeStruct((B, N_pad, D), jnp.float32),
        grid=(B,),
        in_specs=[
            pl.BlockSpec((1, N_pad, D), lambda b: (b, 0, 0)),     # x
            pl.BlockSpec((1, 1, N_pad), lambda b: (b, 0, 0)),     # mask (row)
            pl.BlockSpec((1, N_pad, 1), lambda b: (b, 0, 0)),     # mask (col)
            pl.BlockSpec((1, D), lambda b: (0, 0)),               # ln gamma (resident)
            pl.BlockSpec((1, D), lambda b: (0, 0)),               # ln beta  (resident)
            pl.BlockSpec((D, 3 * inner), lambda b: (0, 0)),       # w_qkv    (resident)
            pl.BlockSpec((inner, D), lambda b: (0, 0)),           # w_out    (resident)
            pl.BlockSpec((1, D), lambda b: (0, 0)),               # b_out    (resident)
        ],
        out_specs=pl.BlockSpec((1, N_pad, D), lambda b: (b, 0, 0)),
        compiler_params=pltpu.CompilerParams(
            dimension_semantics=("parallel",),
            vmem_limit_bytes=_vmem_limit_bytes(N_pad, D, inner)),
    )(x_p, mask_row, mask_col, params["gamma"], params["beta"],
      w_qkv, w_out, params["b_out"])

    out = out[:, :N, :]
    # output_num_tokens is None -> ATS branch skipped; mask returned unchanged.
    return out, mask, None


def reference_forward(x, mask, params, *, heads, dim_head):
    """Pure-JAX f32 reference mirroring the PyTorch forward (correctness check)."""
    B, N, D = x.shape
    inner = heads * dim_head
    scale = dim_head ** -0.5
    mu = jnp.mean(x, axis=-1, keepdims=True)
    var = jnp.mean((x - mu) ** 2, axis=-1, keepdims=True)
    xn = (x - mu) / jnp.sqrt(var + 1e-5) * params["gamma"][0] + params["beta"][0]
    qkv = xn @ params["w_qkv"]
    q, k, v = jnp.split(qkv, 3, axis=-1)

    def split_heads(t):
        return t.reshape(B, N, heads, dim_head).transpose(0, 2, 1, 3)

    q, k, v = map(split_heads, (q, k, v))
    dots = jnp.einsum("bhid,bhjd->bhij", q, k) * scale
    pair = mask[:, None, :, None] & mask[:, None, None, :]
    dots = jnp.where(pair, dots, -jnp.finfo(jnp.float32).max)
    attn = jax.nn.softmax(dots, axis=-1)
    out = jnp.einsum("bhij,bhjd->bhid", attn, v)
    out = out.transpose(0, 2, 1, 3).reshape(B, N, inner)
    return out @ params["w_out"] + params["b_out"][0]


if __name__ == "__main__":
    # N=10 deliberately not a multiple of 8 to exercise the padding path.
    B, N, D = 2, 10, 32
    heads, dim_head = 4, 8
    inner = heads * dim_head

    key = jax.random.PRNGKey(0)
    kx, kq, ko, kb = jax.random.split(key, 4)

    x = jax.random.normal(kx, (B, N, D), dtype=jnp.float32)
    # mask: keep all tokens in batch 0, mask out last 3 tokens in batch 1
    mask = jnp.array([[True] * N,
                      [True] * (N - 3) + [False] * 3], dtype=bool)

    params = {
        "gamma": jnp.ones((1, D), jnp.float32),
        "beta": jnp.zeros((1, D), jnp.float32),
        "w_qkv": 0.05 * jax.random.normal(kq, (D, 3 * inner), dtype=jnp.float32),
        "w_out": 0.05 * jax.random.normal(ko, (inner, D), dtype=jnp.float32),
        "b_out": 0.01 * jax.random.normal(kb, (1, D), dtype=jnp.float32),
    }

    out, out_mask, sampled_ids = attention_forward(
        x, mask, params, heads=heads, dim_head=dim_head)
    out = jax.block_until_ready(out)

    ref = reference_forward(x, mask, params, heads=heads, dim_head=dim_head)
    assert out.shape == (B, N, D)
    assert sampled_ids is None and out_mask.shape == mask.shape

    out_np, ref_np, m = np.asarray(out), np.asarray(ref), np.asarray(mask)
    # Valid (unmasked) query rows must match the reference.  Fully-masked
    # query rows are garbage in both implementations (uniform softmax); with
    # token padding they additionally average over padded keys, so they are
    # only checked for finiteness (same caveat as the PyTorch module).
    assert np.allclose(out_np[m], ref_np[m], rtol=2e-2, atol=2e-2), \
        "mismatch vs JAX reference on valid tokens"
    assert np.all(np.isfinite(out_np))

    print("KERNEL_OK")
</pallas_src>

<mosaic_0001>
module attributes {stable_mosaic.version = 11 : i64} {
  func.func @attention_kernel(%arg0: i32, %arg1: memref<1x16x32xf32, #tpu.memory_space<vmem>>, %arg2: memref<1x1x16xf32, #tpu.memory_space<vmem>>, %arg3: memref<1x16x1xf32, #tpu.memory_space<vmem>>, %arg4: memref<1x32xf32, #tpu.memory_space<vmem>>, %arg5: memref<1x32xf32, #tpu.memory_space<vmem>>, %arg6: memref<32x96xbf16, #tpu.memory_space<vmem>>, %arg7: memref<32x32xbf16, #tpu.memory_space<vmem>>, %arg8: memref<1x32xf32, #tpu.memory_space<vmem>>, %arg9: memref<1x16x32xf32, #tpu.memory_space<vmem>>) attributes {dimension_semantics = [#tpu.dimension_semantics<parallel>], iteration_bounds = array<i64: 2>, scalar_prefetch = 0 : i64, scratch_operands = 0 : i64, tpu.core_type = #tpu.core_type<tc>, window_params = [{transform_indices = @transform_0, window_bounds = array<i64: 1, 16, 32>}, {transform_indices = @transform_1, window_bounds = array<i64: 1, 1, 16>}, {transform_indices = @transform_2, window_bounds = array<i64: 1, 16, 1>}, {pipeline_mode = #tpu.pipeline_mode<synchronous>, transform_indices = @transform_3, window_bounds = array<i64: 1, 32>}, {pipeline_mode = #tpu.pipeline_mode<synchronous>, transform_indices = @transform_4, window_bounds = array<i64: 1, 32>}, {pipeline_mode = #tpu.pipeline_mode<synchronous>, transform_indices = @transform_5, window_bounds = array<i64: 32, 96>}, {pipeline_mode = #tpu.pipeline_mode<synchronous>, transform_indices = @transform_6, window_bounds = array<i64: 32, 32>}, {pipeline_mode = #tpu.pipeline_mode<synchronous>, transform_indices = @transform_7, window_bounds = array<i64: 1, 32>}, {transform_indices = @transform_8, window_bounds = array<i64: 1, 16, 32>}]} {
    %c0 = arith.constant 0 : index
    %c0_0 = arith.constant 0 : index
    %c0_1 = arith.constant 0 : index
    %0 = vector.load %arg1[%c0, %c0_0, %c0_1] : memref<1x16x32xf32, #tpu.memory_space<vmem>>, vector<1x16x32xf32>
    %1 = vector.shape_cast %0 : vector<1x16x32xf32> to vector<16x32xf32>
    %cst = arith.constant dense<0.000000e+00> : vector<16xf32>
    %2 = vector.multi_reduction <add>, %1, %cst [1] : vector<16x32xf32> to vector<16xf32>
    %3 = vector.shape_cast %2 : vector<16xf32> to vector<16x1xf32>
    %cst_2 = arith.constant 3.200000e+01 : f32
    %4 = vector.broadcast %cst_2 : f32 to vector<16x1xf32>
    %5 = arith.divf %3, %4 : vector<16x1xf32>
    %6 = vector.broadcast %5 : vector<16x1xf32> to vector<16x32xf32>
    %7 = arith.subf %1, %6 : vector<16x32xf32>
    %8 = arith.mulf %7, %7 : vector<16x32xf32>
    %cst_3 = arith.constant dense<0.000000e+00> : vector<16xf32>
    %9 = vector.multi_reduction <add>, %8, %cst_3 [1] : vector<16x32xf32> to vector<16xf32>
    %10 = vector.shape_cast %9 : vector<16xf32> to vector<16x1xf32>
    %cst_4 = arith.constant 3.200000e+01 : f32
    %11 = vector.broadcast %cst_4 : f32 to vector<16x1xf32>
    %12 = arith.divf %10, %11 : vector<16x1xf32>
    %13 = vector.broadcast %5 : vector<16x1xf32> to vector<16x32xf32>
    %14 = arith.subf %1, %13 : vector<16x32xf32>
    %cst_5 = arith.constant 9.99999974E-6 : f32
    %15 = vector.broadcast %cst_5 : f32 to vector<16x1xf32>
    %16 = arith.addf %12, %15 : vector<16x1xf32>
    %17 = math.rsqrt %16 : vector<16x1xf32>
    %18 = vector.broadcast %17 : vector<16x1xf32> to vector<16x32xf32>
    %19 = arith.mulf %14, %18 : vector<16x32xf32>
    %c0_6 = arith.constant 0 : index
    %c0_7 = arith.constant 0 : index
    %20 = vector.load %arg4[%c0_6, %c0_7] : memref<1x32xf32, #tpu.memory_space<vmem>>, vector<1x32xf32>
    %21 = vector.broadcast %20 : vector<1x32xf32> to vector<16x32xf32>
    %22 = arith.mulf %19, %21 : vector<16x32xf32>
    %c0_8 = arith.constant 0 : index
    %c0_9 = arith.constant 0 : index
    %23 = vector.load %arg5[%c0_8, %c0_9] : memref<1x32xf32, #tpu.memory_space<vmem>>, vector<1x32xf32>
    %24 = vector.broadcast %23 : vector<1x32xf32> to vector<16x32xf32>
    %25 = arith.addf %22, %24 : vector<16x32xf32>
    %26 = arith.truncf %25 : vector<16x32xf32> to vector<16x32xbf16>
    %c0_10 = arith.constant 0 : index
    %c0_11 = arith.constant 0 : index
    %27 = vector.load %arg6[%c0_10, %c0_11] : memref<32x96xbf16, #tpu.memory_space<vmem>>, vector<32x96xbf16>
    %cst_12 = arith.constant dense<0.000000e+00> : vector<16x96xf32>
    %28 = tpu.matmul %26, %27, %cst_12 {dimension_numbers = #tpu.dot_dimension_numbers<[1], [0], [0], [1], [0, 0, 1, 1], [], []>} : vector<16x32xbf16>, vector<32x96xbf16>, vector<16x96xf32> -> vector<16x96xf32>
    %29 = arith.truncf %28 : vector<16x96xf32> to vector<16x96xbf16>
    %c0_13 = arith.constant 0 : index
    %c0_14 = arith.constant 0 : index
    %c0_15 = arith.constant 0 : index
    %30 = vector.load %arg3[%c0_13, %c0_14, %c0_15] : memref<1x16x1xf32, #tpu.memory_space<vmem>>, vector<1x16x1xf32>
    %31 = vector.shape_cast %30 : vector<1x16x1xf32> to vector<16x1xf32>
    %c0_16 = arith.constant 0 : index
    %c0_17 = arith.constant 0 : index
    %c0_18 = arith.constant 0 : index
    %32 = vector.load %arg2[%c0_16, %c0_17, %c0_18] : memref<1x1x16xf32, #tpu.memory_space<vmem>>, vector<1x1x16xf32>
    %33 = vector.shape_cast %32 : vector<1x1x16xf32> to vector<1x16xf32>
    %34 = vector.broadcast %31 : vector<16x1xf32> to vector<16x16xf32>
    %35 = vector.broadcast %33 : vector<1x16xf32> to vector<16x16xf32>
    %36 = arith.mulf %34, %35 : vector<16x16xf32>
    %cst_19 = arith.constant 5.000000e-01 : f32
    %37 = vector.broadcast %cst_19 : f32 to vector<16x16xf32>
    %38 = arith.cmpf ogt, %36, %37 : vector<16x16xf32>
    %cst_20 = arith.constant 0.000000e+00 : f32
    %cst_21 = arith.constant -3.40282347E+38 : f32
    %39 = vector.broadcast %cst_20 : f32 to vector<16x16xf32>
    %40 = vector.broadcast %cst_21 : f32 to vector<16x16xf32>
    %41 = arith.select %38, %39, %40 : vector<16x16xi1>, vector<16x16xf32>
    %42 = vector.extract_strided_slice %29 {offsets = [0, 0], sizes = [16, 8], strides = [1, 1]} : vector<16x96xbf16> to vector<16x8xbf16>
    %43 = vector.extract_strided_slice %29 {offsets = [0, 32], sizes = [16, 8], strides = [1, 1]} : vector<16x96xbf16> to vector<16x8xbf16>
    %44 = vector.extract_strided_slice %29 {offsets = [0, 64], sizes = [16, 8], strides = [1, 1]} : vector<16x96xbf16> to vector<16x8xbf16>
    %cst_22 = arith.constant dense<0.000000e+00> : vector<16x16xf32>
    %45 = tpu.matmul %42, %43, %cst_22 {dimension_numbers = #tpu.dot_dimension_numbers<[1], [1], [0], [0], [0, 0, 1, 0], [], []>} : vector<16x8xbf16>, vector<16x8xbf16>, vector<16x16xf32> -> vector<16x16xf32>
    %46 = arith.addf %45, %41 : vector<16x16xf32>
    %cst_23 = arith.constant dense<0xFF800000> : vector<16xf32>
    %47 = vector.multi_reduction <maximumf>, %46, %cst_23 [1] : vector<16x16xf32> to vector<16xf32>
    %48 = vector.shape_cast %47 : vector<16xf32> to vector<16x1xf32>
    %49 = vector.broadcast %48 : vector<16x1xf32> to vector<16x16xf32>
    %50 = arith.subf %46, %49 : vector<16x16xf32>
    %51 = math.exp %50 : vector<16x16xf32>
    %cst_24 = arith.constant dense<0.000000e+00> : vector<16xf32>
    %52 = vector.multi_reduction <add>, %51, %cst_24 [1] : vector<16x16xf32> to vector<16xf32>
    %53 = vector.shape_cast %52 : vector<16xf32> to vector<16x1xf32>
    %54 = tpu.reciprocal %53 {approx = true} : vector<16x1xf32> -> vector<16x1xf32>
    %55 = vector.broadcast %54 : vector<16x1xf32> to vector<16x16xf32>
    %56 = arith.mulf %51, %55 : vector<16x16xf32>
    %57 = arith.truncf %56 : vector<16x16xf32> to vector<16x16xbf16>
    %cst_25 = arith.constant dense<0.000000e+00> : vector<16x8xf32>
    %58 = tpu.matmul %57, %44, %cst_25 {dimension_numbers = #tpu.dot_dimension_numbers<[1], [0], [0], [1], [0, 0, 1, 1], [], []>} : vector<16x16xbf16>, vector<16x8xbf16>, vector<16x8xf32> -> vector<16x8xf32>
    %59 = arith.truncf %58 : vector<16x8xf32> to vector<16x8xbf16>
    %60 = vector.extract_strided_slice %29 {offsets = [0, 8], sizes = [16, 8], strides = [1, 1]} : vector<16x96xbf16> to vector<16x8xbf16>
    %61 = vector.extract_strided_slice %29 {offsets = [0, 40], sizes = [16, 8], strides = [1, 1]} : vector<16x96xbf16> to vector<16x8xbf16>
    %62 = vector.extract_strided_slice %29 {offsets = [0, 72], sizes = [16, 8], strides = [1, 1]} : vector<16x96xbf16> to vector<16x8xbf16>
    %cst_26 = arith.constant dense<0.000000e+00> : vector<16x16xf32>
    %63 = tpu.matmul %60, %61, %cst_26 {dimension_numbers = #tpu.dot_dimension_numbers<[1], [1], [0], [0], [0, 0, 1, 0], [], []>} : vector<16x8xbf16>, vector<16x8xbf16>, vector<16x16xf32> -> vector<16x16xf32>
    %64 = arith.addf %63, %41 : vector<16x16xf32>
    %cst_27 = arith.constant dense<0xFF800000> : vector<16xf32>
    %65 = vector.multi_reduction <maximumf>, %64, %cst_27 [1] : vector<16x16xf32> to vector<16xf32>
    %66 = vector.shape_cast %65 : vector<16xf32> to vector<16x1xf32>
    %67 = vector.broadcast %66 : vector<16x1xf32> to vector<16x16xf32>
    %68 = arith.subf %64, %67 : vector<16x16xf32>
    %69 = math.exp %68 : vector<16x16xf32>
    %cst_28 = arith.constant dense<0.000000e+00> : vector<16xf32>
    %70 = vector.multi_reduction <add>, %69, %cst_28 [1] : vector<16x16xf32> to vector<16xf32>
    %71 = vector.shape_cast %70 : vector<16xf32> to vector<16x1xf32>
    %72 = tpu.reciprocal %71 {approx = true} : vector<16x1xf32> -> vector<16x1xf32>
    %73 = vector.broadcast %72 : vector<16x1xf32> to vector<16x16xf32>
    %74 = arith.mulf %69, %73 : vector<16x16xf32>
    %75 = arith.truncf %74 : vector<16x16xf32> to vector<16x16xbf16>
    %cst_29 = arith.constant dense<0.000000e+00> : vector<16x8xf32>
    %76 = tpu.matmul %75, %62, %cst_29 {dimension_numbers = #tpu.dot_dimension_numbers<[1], [0], [0], [1], [0, 0, 1, 1], [], []>} : vector<16x16xbf16>, vector<16x8xbf16>, vector<16x8xf32> -> vector<16x8xf32>
    %77 = arith.truncf %76 : vector<16x8xf32> to vector<16x8xbf16>
    %78 = vector.extract_strided_slice %29 {offsets = [0, 16], sizes = [16, 8], strides = [1, 1]} : vector<16x96xbf16> to vector<16x8xbf16>
    %79 = vector.extract_strided_slice %29 {offsets = [0, 48], sizes = [16, 8], strides = [1, 1]} : vector<16x96xbf16> to vector<16x8xbf16>
    %80 = vector.extract_strided_slice %29 {offsets = [0, 80], sizes = [16, 8], strides = [1, 1]} : vector<16x96xbf16> to vector<16x8xbf16>
    %cst_30 = arith.constant dense<0.000000e+00> : vector<16x16xf32>
    %81 = tpu.matmul %78, %79, %cst_30 {dimension_numbers = #tpu.dot_dimension_numbers<[1], [1], [0], [0], [0, 0, 1, 0], [], []>} : vector<16x8xbf16>, vector<16x8xbf16>, vector<16x16xf32> -> vector<16x16xf32>
    %82 = arith.addf %81, %41 : vector<16x16xf32>
    %cst_31 = arith.constant dense<0xFF800000> : vector<16xf32>
    %83 = vector.multi_reduction <maximumf>, %82, %cst_31 [1] : vector<16x16xf32> to vector<16xf32>
    %84 = vector.shape_cast %83 : vector<16xf32> to vector<16x1xf32>
    %85 = vector.broadcast %84 : vector<16x1xf32> to vector<16x16xf32>
    %86 = arith.subf %82, %85 : vector<16x16xf32>
    %87 = math.exp %86 : vector<16x16xf32>
    %cst_32 = arith.constant dense<0.000000e+00> : vector<16xf32>
    %88 = vector.multi_reduction <add>, %87, %cst_32 [1] : vector<16x16xf32> to vector<16xf32>
    %89 = vector.shape_cast %88 : vector<16xf32> to vector<16x1xf32>
    %90 = tpu.reciprocal %89 {approx = true} : vector<16x1xf32> -> vector<16x1xf32>
    %91 = vector.broadcast %90 : vector<16x1xf32> to vector<16x16xf32>
    %92 = arith.mulf %87, %91 : vector<16x16xf32>
    %93 = arith.truncf %92 : vector<16x16xf32> to vector<16x16xbf16>
    %cst_33 = arith.constant dense<0.000000e+00> : vector<16x8xf32>
    %94 = tpu.matmul %93, %80, %cst_33 {dimension_numbers = #tpu.dot_dimension_numbers<[1], [0], [0], [1], [0, 0, 1, 1], [], []>} : vector<16x16xbf16>, vector<16x8xbf16>, vector<16x8xf32> -> vector<16x8xf32>
    %95 = arith.truncf %94 : vector<16x8xf32> to vector<16x8xbf16>
    %96 = vector.extract_strided_slice %29 {offsets = [0, 24], sizes = [16, 8], strides = [1, 1]} : vector<16x96xbf16> to vector<16x8xbf16>
    %97 = vector.extract_strided_slice %29 {offsets = [0, 56], sizes = [16, 8], strides = [1, 1]} : vector<16x96xbf16> to vector<16x8xbf16>
    %98 = vector.extract_strided_slice %29 {offsets = [0, 88], sizes = [16, 8], strides = [1, 1]} : vector<16x96xbf16> to vector<16x8xbf16>
    %cst_34 = arith.constant dense<0.000000e+00> : vector<16x16xf32>
    %99 = tpu.matmul %96, %97, %cst_34 {dimension_numbers = #tpu.dot_dimension_numbers<[1], [1], [0], [0], [0, 0, 1, 0], [], []>} : vector<16x8xbf16>, vector<16x8xbf16>, vector<16x16xf32> -> vector<16x16xf32>
    %100 = arith.addf %99, %41 : vector<16x16xf32>
    %cst_35 = arith.constant dense<0xFF800000> : vector<16xf32>
    %101 = vector.multi_reduction <maximumf>, %100, %cst_35 [1] : vector<16x16xf32> to vector<16xf32>
    %102 = vector.shape_cast %101 : vector<16xf32> to vector<16x1xf32>
    %103 = vector.broadcast %102 : vector<16x1xf32> to vector<16x16xf32>
    %104 = arith.subf %100, %103 : vector<16x16xf32>
    %105 = math.exp %104 : vector<16x16xf32>
    %cst_36 = arith.constant dense<0.000000e+00> : vector<16xf32>
    %106 = vector.multi_reduction <add>, %105, %cst_36 [1] : vector<16x16xf32> to vector<16xf32>
    %107 = vector.shape_cast %106 : vector<16xf32> to vector<16x1xf32>
    %108 = tpu.reciprocal %107 {approx = true} : vector<16x1xf32> -> vector<16x1xf32>
    %109 = vector.broadcast %108 : vector<16x1xf32> to vector<16x16xf32>
    %110 = arith.mulf %105, %109 : vector<16x16xf32>
    %111 = arith.truncf %110 : vector<16x16xf32> to vector<16x16xbf16>
    %cst_37 = arith.constant dense<0.000000e+00> : vector<16x8xf32>
    %112 = tpu.matmul %111, %98, %cst_37 {dimension_numbers = #tpu.dot_dimension_numbers<[1], [0], [0], [1], [0, 0, 1, 1], [], []>} : vector<16x16xbf16>, vector<16x8xbf16>, vector<16x8xf32> -> vector<16x8xf32>
    %113 = arith.truncf %112 : vector<16x8xf32> to vector<16x8xbf16>
    %114 = tpu.concatenate %59, %77, %95, %113 in 1 : vector<16x8xbf16>, vector<16x8xbf16>, vector<16x8xbf16>, vector<16x8xbf16> -> vector<16x32xbf16>
    %c0_38 = arith.constant 0 : index
    %c0_39 = arith.constant 0 : index
    %115 = vector.load %arg7[%c0_38, %c0_39] : memref<32x32xbf16, #tpu.memory_space<vmem>>, vector<32x32xbf16>
    %cst_40 = arith.constant dense<0.000000e+00> : vector<16x32xf32>
    %116 = tpu.matmul %114, %115, %cst_40 {dimension_numbers = #tpu.dot_dimension_numbers<[1], [0], [0], [1], [0, 0, 1, 1], [], []>} : vector<16x32xbf16>, vector<32x32xbf16>, vector<16x32xf32> -> vector<16x32xf32>
    %c0_41 = arith.constant 0 : index
    %c0_42 = arith.constant 0 : index
    %117 = vector.load %arg8[%c0_41, %c0_42] : memref<1x32xf32, #tpu.memory_space<vmem>>, vector<1x32xf32>
    %118 = vector.broadcast %117 : vector<1x32xf32> to vector<16x32xf32>
    %119 = arith.addf %116, %118 : vector<16x32xf32>
    %c0_43 = arith.constant 0 : index
    %c0_44 = arith.constant 0 : index
    %c0_45 = arith.constant 0 : index
    %120 = vector.load %arg9[%c0_43, %c0_44, %c0_45] : memref<1x16x32xf32, #tpu.memory_space<vmem>>, vector<1x16x32xf32>
    %121 = vector.shape_cast %120 : vector<1x16x32xf32> to vector<16x32xf32>
    %122 = vector.shape_cast %119 : vector<16x32xf32> to vector<1x16x32xf32>
    tpu.vector_store %arg9[%c0_43, %c0_44, %c0_45], %122 {strides = array<i32>} : memref<1x16x32xf32, #tpu.memory_space<vmem>>, vector<1x16x32xf32>,
    return
  }
  func.func @transform_0(%arg0: i32) -> (i32, i32, i32) {
    %c0_i32 = arith.constant 0 : i32
    %c0_i32_0 = arith.constant 0 : i32
    %c0_i32_1 = arith.constant 0 : i32
    return %arg0, %c0_i32, %c0_i32_0 : i32, i32, i32
  }
  func.func @transform_1(%arg0: i32) -> (i32, i32, i32) {
    %c0_i32 = arith.constant 0 : i32
    %c0_i32_0 = arith.constant 0 : i32
    %c0_i32_1 = arith.constant 0 : i32
    return %arg0, %c0_i32, %c0_i32_0 : i32, i32, i32
  }
  func.func @transform_2(%arg0: i32) -> (i32, i32, i32) {
    %c0_i32 = arith.constant 0 : i32
    %c0_i32_0 = arith.constant 0 : i32
    %c0_i32_1 = arith.constant 0 : i32
    return %arg0, %c0_i32, %c0_i32_0 : i32, i32, i32
  }
  func.func @transform_3(%arg0: i32) -> (i32, i32) {
    %c0_i32 = arith.constant 0 : i32
    %c0_i32_0 = arith.constant 0 : i32
    %c0_i32_1 = arith.constant 0 : i32
    return %c0_i32, %c0_i32_0 : i32, i32
  }
  func.func @transform_4(%arg0: i32) -> (i32, i32) {
    %c0_i32 = arith.constant 0 : i32
    %c0_i32_0 = arith.constant 0 : i32
    %c0_i32_1 = arith.constant 0 : i32
    return %c0_i32, %c0_i32_0 : i32, i32
  }
  func.func @transform_5(%arg0: i32) -> (i32, i32) {
    %c0_i32 = arith.constant 0 : i32
    %c0_i32_0 = arith.constant 0 : i32
    %c0_i32_1 = arith.constant 0 : i32
    return %c0_i32, %c0_i32_0 : i32, i32
  }
  func.func @transform_6(%arg0: i32) -> (i32, i32) {
    %c0_i32 = arith.constant 0 : i32
    %c0_i32_0 = arith.constant 0 : i32
    %c0_i32_1 = arith.constant 0 : i32
    return %c0_i32, %c0_i32_0 : i32, i32
  }
  func.func @transform_7(%arg0: i32) -> (i32, i32) {
    %c0_i32 = arith.constant 0 : i32
    %c0_i32_0 = arith.constant 0 : i32
    %c0_i32_1 = arith.constant 0 : i32
    return %c0_i32, %c0_i32_0 : i32, i32
  }
  func.func @transform_8(%arg0: i32) -> (i32, i32, i32) {
    %c0_i32 = arith.constant 0 : i32
    %c0_i32_0 = arith.constant 0 : i32
    %c0_i32_1 = arith.constant 0 : i32
    return %arg0, %c0_i32, %c0_i32_0 : i32, i32, i32
  }
}

</mosaic_0001>

<llo_original>
// kernel: tpu_custom_call.1
$region0: #{tpu_custom_call.1}
  #allocation0 [shape = 'u32[]', space=smem, size = 0x4, offset = 0x4, fixed_abs, tag = 'smem constant byte address 0x4 - core index']
  #allocation1 [shape = 'u32[72,128]{1,0:T(1,128)}', space=vmem, size = 0x9000, scoped, tag = 'internal scratch']
  %s0 = inlined_call_operand.vmem [shape: f32[2,16,32], index: 0, kind: input, shape index: {}]
  %s1 = inlined_call_operand.vmem [shape: f32[2,1,16], index: 1, kind: input, shape index: {}]
  %s2 = inlined_call_operand.vmem [shape: f32[2,16,1], index: 2, kind: input, shape index: {}]
  %s3 = inlined_call_operand.vmem [shape: f32[1,32], index: 3, kind: input, shape index: {}]
  %s4 = inlined_call_operand.vmem [shape: f32[1,32], index: 4, kind: input, shape index: {}]
  %s5 = inlined_call_operand.hbm [shape: bf16[32,96], index: 5, kind: input, shape index: {}]
  %s6 = inlined_call_operand.hbm [shape: bf16[32,32], index: 6, kind: input, shape index: {}]
  %s7 = inlined_call_operand.vmem [shape: f32[1,32], index: 7, kind: input, shape index: {}]
  %s8 = inlined_call_operand.hbm [shape: f32[2,16,32], index: 8, kind: output, shape index: {}]
  %s9 = sld [smem:[#allocation0]]
  $region73: #{tpu_custom_call.1} parent=0
    _
  %s11 = ssub.s32 1, %s9
  %s12 = scalar_select 0, %s11, %s9
  $region1: #{tpu_custom_call.1} parent=0
    #allocation2 [shape = 'u8[8192]{0}', space=vmem, size = 0x2000, scoped, tag = 'input window, operand 5, single buffered']
    #allocation3 [shape = 's32[2]{0}', space=sflag, size = 0x8, scoped, tag = 'scoped memory for tpu_custom_call.1']
    #allocation4 [shape = 's32[2]{0}', space=sflag, size = 0x8, scoped, tag = 'scoped memory for tpu_custom_call.1']
    #allocation5 [shape = 'u8[8192]{0}', space=vmem, size = 0x2000, scoped, tag = 'input window, operand 6, single buffered']
    #allocation6 [shape = 's32[1]{0}', space=sflag, size = 0x4, scoped, tag = 'scoped memory for tpu_custom_call.1']
    #allocation7 [shape = 'u8[16384]{0}', space=vmem, size = 0x4000, scoped, tag = 'output window, operand 0']
    %13 = vsyncpa [#allocation3], 0
    %14 = vsyncpa [#allocation6], 0
    %15 = vsyncpa [#allocation4], 0
    %s16 = scalar_lea.sflag [#allocation4], 1
    %17 = vsyncpa %s16, 0
    loop: start=0, step=1, limit=4
    $region2: #{tpu_custom_call.1} parent=1 // loop_pre_header
      _
    $region3: #{tpu_custom_call.1} parent=1 // loop_header
      %s19 = sphi 0, %s23
      %p20 = scmp.ge.s32.totalorder %s19, 4
      %s29 = sphi 0, %s31
      %s32 = sphi 0, %s29
      %s33 = sphi 0, %s32
      %s49 = sphi 0, %s33
      %s55 = sphi 0, %s57
      %s58 = sphi 0, %s55
      %s59 = sphi 0, %s58
      %s75 = sphi 0, %s59
      %s81 = sphi 0, %s83
      %s84 = sphi 0, %s81
      %s85 = sphi 0, %s84
      %s101 = sphi 0, %s85
      %s105 = sphi 0, %s105
      %s107 = sphi 0, %s105
      %s108 = sphi 0, %s107
      %s122 = sphi 0, %s108
      %s126 = sphi 0, %s126
      %s128 = sphi 0, %s126
      %s129 = sphi 0, %s128
      %s143 = sphi 0, %s129
      %s147 = sphi 0, %s147
      %s149 = sphi 0, %s147
      %s150 = sphi 0, %s149
      %s164 = sphi 0, %s150
      %s168 = sphi 0, %s168
      %s170 = sphi 0, %s168
      %s171 = sphi 0, %s170
      %s185 = sphi 0, %s171
      %s189 = sphi 0, %s189
      %s191 = sphi 0, %s189
      %s192 = sphi 0, %s191
      %s206 = sphi 0, %s192
      %s212 = sphi 0, %s214
      %s215 = sphi 0, %s212
      %s216 = sphi 0, %s215
      %s232 = sphi 0, %s216
    $region4: #{tpu_custom_call.1} parent=1 // loop_header_branch
      %22 = sbr.rel (%p20) target = $region8
    $region5: #{tpu_custom_call.1} parent=1 // loop_body
      %s24 = ssub.s32 %s19, 1
      %s25 = ssub.s32 %s19, 2
      %s26 = sadd.s32 %s19, 1
      %s27 = ssub.s32 %s19, %s26
      %p28 = scmp.eq.s32.totalorder %s27, 0
      %s30 = sadd.s32 %s29, 1
      %s31 = scalar_select %p28, %s29, %s30
      %p34 = pneg %p28
      %p35 = scmp.eq.s32.totalorder %s19, 1
      %p36 = por %p34, %p35
      %p37 = scmp.ne.s32.totalorder %s29, %s32
      %p38 = scmp.eq.s32.totalorder %s19, 0
      %p39 = por %p37, %p38
      %p40 = scmp.ne.s32.totalorder %s29, %s32
      %p41 = scmp.eq.s32.totalorder %s24, 1
      %p42 = por %p40, %p41
      %p43 = scmp.ne.s32.totalorder %s32, %s33
      %p44 = scmp.eq.s32.totalorder %s24, 0
      %p45 = por %p43, %p44
      %p46 = scmp.ne.s32.totalorder %s32, %s33
      %p47 = scmp.eq.s32.totalorder %s25, 1
      %p48 = por %p46, %p47
      %p50 = scmp.ne.s32.totalorder %s33, %s49
      %p51 = scmp.eq.s32.totalorder %s25, 0
      %p52 = por %p50, %p51
      %s53 = ssub.s32 %s19, %s26
      %p54 = scmp.eq.s32.totalorder %s53, 0
      %s56 = sadd.s32 %s55, 1
      %s57 = scalar_select %p54, %s55, %s56
      %p60 = pneg %p54
      %p61 = scmp.eq.s32.totalorder %s19, 1
      %p62 = por %p60, %p61
      %p63 = scmp.ne.s32.totalorder %s55, %s58
      %p64 = scmp.eq.s32.totalorder %s19, 0
      %p65 = por %p63, %p64
      %p66 = scmp.ne.s32.totalorder %s55, %s58
      %p67 = scmp.eq.s32.totalorder %s24, 1
      %p68 = por %p66, %p67
      %p69 = scmp.ne.s32.totalorder %s58, %s59
      %p70 = scmp.eq.s32.totalorder %s24, 0
      %p71 = por %p69, %p70
      %p72 = scmp.ne.s32.totalorder %s58, %s59
      %p73 = scmp.eq.s32.totalorder %s25, 1
      %p74 = por %p72, %p73
      %p76 = scmp.ne.s32.totalorder %s59, %s75
      %p77 = scmp.eq.s32.totalorder %s25, 0
      %p78 = por %p76, %p77
      %s79 = ssub.s32 %s19, %s26
      %p80 = scmp.eq.s32.totalorder %s79, 0
      %s82 = sadd.s32 %s81, 1
      %s83 = scalar_select %p80, %s81, %s82
      %p86 = pneg %p80
      %p87 = scmp.eq.s32.totalorder %s19, 1
      %p88 = por %p86, %p87
      %p89 = scmp.ne.s32.totalorder %s81, %s84
      %p90 = scmp.eq.s32.totalorder %s19, 0
      %p91 = por %p89, %p90
      %p92 = scmp.ne.s32.totalorder %s81, %s84
      %p93 = scmp.eq.s32.totalorder %s24, 1
      %p94 = por %p92, %p93
      %p95 = scmp.ne.s32.totalorder %s84, %s85
      %p96 = scmp.eq.s32.totalorder %s24, 0
      %p97 = por %p95, %p96
      %p98 = scmp.ne.s32.totalorder %s84, %s85
      %p99 = scmp.eq.s32.totalorder %s25, 1
      %p100 = por %p98, %p99
      %p102 = scmp.ne.s32.totalorder %s85, %s101
      %p103 = scmp.eq.s32.totalorder %s25, 0
      %p104 = por %p102, %p103
      %s106 = sadd.s32 %s105, 1
      %p109 = scmp.eq.s32.totalorder %s19, 1
      %p110 = scmp.ne.s32.totalorder %s105, %s107
      %p111 = scmp.eq.s32.totalorder %s19, 0
      %p112 = por %p110, %p111
      %p113 = scmp.ne.s32.totalorder %s105, %s107
      %p114 = scmp.eq.s32.totalorder %s24, 1
      %p115 = por %p113, %p114
      %p116 = scmp.ne.s32.totalorder %s107, %s108
      %p117 = scmp.eq.s32.totalorder %s24, 0
      %p118 = por %p116, %p117
      %p119 = scmp.ne.s32.totalorder %s107, %s108
      %p120 = scmp.eq.s32.totalorder %s25, 1
      %p121 = por %p119, %p120
      %p123 = scmp.ne.s32.totalorder %s108, %s122
      %p124 = scmp.eq.s32.totalorder %s25, 0
      %p125 = por %p123, %p124
      %s127 = sadd.s32 %s126, 1
      %p130 = scmp.eq.s32.totalorder %s19, 1
      %p131 = scmp.ne.s32.totalorder %s126, %s128
      %p132 = scmp.eq.s32.totalorder %s19, 0
      %p133 = por %p131, %p132
      %p134 = scmp.ne.s32.totalorder %s126, %s128
      %p135 = scmp.eq.s32.totalorder %s24, 1
      %p136 = por %p134, %p135
      %p137 = scmp.ne.s32.totalorder %s128, %s129
      %p138 = scmp.eq.s32.totalorder %s24, 0
      %p139 = por %p137, %p138
      %p140 = scmp.ne.s32.totalorder %s128, %s129
      %p141 = scmp.eq.s32.totalorder %s25, 1
      %p142 = por %p140, %p141
      %p144 = scmp.ne.s32.totalorder %s129, %s143
      %p145 = scmp.eq.s32.totalorder %s25, 0
      %p146 = por %p144, %p145
      %s148 = sadd.s32 %s147, 1
      %p151 = scmp.eq.s32.totalorder %s19, 1
      %p152 = scmp.ne.s32.totalorder %s147, %s149
      %p153 = scmp.eq.s32.totalorder %s19, 0
      %p154 = por %p152, %p153
      %p155 = scmp.ne.s32.totalorder %s147, %s149
      %p156 = scmp.eq.s32.totalorder %s24, 1
      %p157 = por %p155, %p156
      %p158 = scmp.ne.s32.totalorder %s149, %s150
      %p159 = scmp.eq.s32.totalorder %s24, 0
      %p160 = por %p158, %p159
      %p161 = scmp.ne.s32.totalorder %s149, %s150
      %p162 = scmp.eq.s32.totalorder %s25, 1
      %p163 = por %p161, %p162
      %p165 = scmp.ne.s32.totalorder %s150, %s164
      %p166 = scmp.eq.s32.totalorder %s25, 0
      %p167 = por %p165, %p166
      %s169 = sadd.s32 %s168, 1
      %p172 = scmp.eq.s32.totalorder %s19, 1
      %p173 = scmp.ne.s32.totalorder %s168, %s170
      %p174 = scmp.eq.s32.totalorder %s19, 0
      %p175 = por %p173, %p174
      %p176 = scmp.ne.s32.totalorder %s168, %s170
      %p177 = scmp.eq.s32.totalorder %s24, 1
      %p178 = por %p176, %p177
      %p179 = scmp.ne.s32.totalorder %s170, %s171
      %p180 = scmp.eq.s32.totalorder %s24, 0
      %p181 = por %p179, %p180
      %p182 = scmp.ne.s32.totalorder %s170, %s171
      %p183 = scmp.eq.s32.totalorder %s25, 1
      %p184 = por %p182, %p183
      %p186 = scmp.ne.s32.totalorder %s171, %s185
      %p187 = scmp.eq.s32.totalorder %s25, 0
      %p188 = por %p186, %p187
      %s190 = sadd.s32 %s189, 1
      %p193 = scmp.eq.s32.totalorder %s19, 1
      %p194 = scmp.ne.s32.totalorder %s189, %s191
      %p195 = scmp.eq.s32.totalorder %s19, 0
      %p196 = por %p194, %p195
      %p197 = scmp.ne.s32.totalorder %s189, %s191
      %p198 = scmp.eq.s32.totalorder %s24, 1
      %p199 = por %p197, %p198
      %p200 = scmp.ne.s32.totalorder %s191, %s192
      %p201 = scmp.eq.s32.totalorder %s24, 0
      %p202 = por %p200, %p201
      %p203 = scmp.ne.s32.totalorder %s191, %s192
      %p204 = scmp.eq.s32.totalorder %s25, 1
      %p205 = por %p203, %p204
      %p207 = scmp.ne.s32.totalorder %s192, %s206
      %p208 = scmp.eq.s32.totalorder %s25, 0
      %p209 = por %p207, %p208
      %s210 = ssub.s32 %s19, %s26
      %p211 = scmp.eq.s32.totalorder %s210, 0
      %s213 = sadd.s32 %s212, 1
      %s214 = scalar_select %p211, %s212, %s213
      %p217 = pneg %p211
      %p218 = scmp.eq.s32.totalorder %s19, 1
      %p219 = por %p217, %p218
      %p220 = scmp.ne.s32.totalorder %s212, %s215
      %p221 = scmp.eq.s32.totalorder %s19, 0
      %p222 = por %p220, %p221
      %p223 = scmp.ne.s32.totalorder %s212, %s215
      %p224 = scmp.eq.s32.totalorder %s24, 1
      %p225 = por %p223, %p224
      %p226 = scmp.ne.s32.totalorder %s215, %s216
      %p227 = scmp.eq.s32.totalorder %s24, 0
      %p228 = por %p226, %p227
      %p229 = scmp.ne.s32.totalorder %s215, %s216
      %p230 = scmp.eq.s32.totalorder %s25, 1
      %p231 = por %p229, %p230
      %p233 = scmp.ne.s32.totalorder %s216, %s232
      %p234 = scmp.eq.s32.totalorder %s25, 0
      %p235 = por %p233, %p234
      %p236 = scmp.le.s32.totalorder 1, %s19
      %p237 = scmp.lt.s32.totalorder %s19, 3
      %p238 = pnand %p236, %p237
      %p239 = pneg %p238
      // Predicated region
      $region9: #{tpu_custom_call.1} parent=5 // pred_check
        _
      $region10: #{tpu_custom_call.1} parent=5 // pred_check_branch
        %241 = sbr.rel (%p238) target = $region12
      $region11: #{tpu_custom_call.1} parent=5 // pred_region
        %s242 = ssub.s32 %s19, 1
        // Predicated region
        $region13: #{tpu_custom_call.1} parent=11 // pred_check
          %p243 = pneg %p118
        $region14: #{tpu_custom_call.1} parent=11 // pred_check_branch
          %245 = sbr.rel (%p243) target = $region16
        $region15: #{tpu_custom_call.1} parent=11 // pred_region
          _
        $region16: #{tpu_custom_call.1} parent=11 // pred_fallthru
          _
        // Predicated region
        $region17: #{tpu_custom_call.1} parent=11 // pred_check
          %p246 = pneg %p139
        $region18: #{tpu_custom_call.1} parent=11 // pred_check_branch
          %248 = sbr.rel (%p246) target = $region20
        $region19: #{tpu_custom_call.1} parent=11 // pred_region
          _
        $region20: #{tpu_custom_call.1} parent=11 // pred_fallthru
          _
        // Predicated region
        $region21: #{tpu_custom_call.1} parent=11 // pred_check
          %p249 = pneg %p160
        $region22: #{tpu_custom_call.1} parent=11 // pred_check_branch
          %251 = sbr.rel (%p249) target = $region24
        $region23: #{tpu_custom_call.1} parent=11 // pred_region
          %253 = vsyncadd [#allocation3], 0
          %s254 = sshll.u32 %s5, 4
          %s255 = int_to_ptr.hbm [resolvable:$true] %s254
          %s256 = sshll.u32 [#allocation2], 4
          %s257 = int_to_ptr.vmem [resolvable:$true] %s256
          %262 = dma.hbm_to_vmem [thread:$0]  %s255, 256, %s257, [#allocation3], 64, 64, 4
        $region24: #{tpu_custom_call.1} parent=11 // pred_fallthru
          _
        // Predicated region
        $region25: #{tpu_custom_call.1} parent=11 // pred_check
          %p263 = pneg %p181
        $region26: #{tpu_custom_call.1} parent=11 // pred_check_branch
          %265 = sbr.rel (%p263) target = $region28
        $region27: #{tpu_custom_call.1} parent=11 // pred_region
          %267 = vsyncadd [#allocation6], 0
          %s268 = sshll.u32 %s6, 4
          %s269 = int_to_ptr.hbm [resolvable:$true] %s268
          %s270 = sshll.u32 [#allocation5], 4
          %s271 = int_to_ptr.vmem [resolvable:$true] %s270
          %276 = dma.hbm_to_vmem [thread:$0]  %s269, 256, %s271, [#allocation6], 64, 64, 4
        $region28: #{tpu_custom_call.1} parent=11 // pred_fallthru
          _
        // Predicated region
        $region29: #{tpu_custom_call.1} parent=11 // pred_check
          %p277 = pneg %p202
        $region30: #{tpu_custom_call.1} parent=11 // pred_check_branch
          %279 = sbr.rel (%p277) target = $region32
        $region31: #{tpu_custom_call.1} parent=11 // pred_region
          _
        $region32: #{tpu_custom_call.1} parent=11 // pred_fallthru
          _
      $region12: #{tpu_custom_call.1} parent=5 // pred_fallthru
        _
      %p280 = scmp.lt.s32.totalorder %s19, 2
      // Predicated region
      $region33: #{tpu_custom_call.1} parent=5 // pred_check
        %p281 = pneg %p280
      $region34: #{tpu_custom_call.1} parent=5 // pred_check_branch
        %283 = sbr.rel (%p281) target = $region36
      $region35: #{tpu_custom_call.1} parent=5 // pred_region
        // Predicated region
        $region37: #{tpu_custom_call.1} parent=35 // pred_check
          %p284 = pneg %p39
        $region38: #{tpu_custom_call.1} parent=35 // pred_check_branch
          %286 = sbr.rel (%p284) target = $region40
        $region39: #{tpu_custom_call.1} parent=35 // pred_region
          %p287 = scmp.lt.s32.totalorder %s19, 1
          %s288 = scalar_select %p287, %s19, 1
          %s289 = smul.addr %s288, 2
          %s290 = smul.addr %s289, 8
          %s291 = scalar_lea.vmem %s0, %s290
        $region40: #{tpu_custom_call.1} parent=35 // pred_fallthru
          _
        // Predicated region
        $region41: #{tpu_custom_call.1} parent=35 // pred_check
          %p292 = pneg %p65
        $region42: #{tpu_custom_call.1} parent=35 // pred_check_branch
          %294 = sbr.rel (%p292) target = $region44
        $region43: #{tpu_custom_call.1} parent=35 // pred_region
          %p295 = scmp.lt.s32.totalorder %s19, 1
          %s296 = scalar_select %p295, %s19, 1
          %s297 = scalar_lea.vmem %s1, %s296
        $region44: #{tpu_custom_call.1} parent=35 // pred_fallthru
          _
        // Predicated region
        $region45: #{tpu_custom_call.1} parent=35 // pred_check
          %p298 = pneg %p91
        $region46: #{tpu_custom_call.1} parent=35 // pred_check_branch
          %300 = sbr.rel (%p298) target = $region48
        $region47: #{tpu_custom_call.1} parent=35 // pred_region
          %p301 = scmp.lt.s32.totalorder %s19, 1
          %s302 = scalar_select %p301, %s19, 1
          %s303 = smul.addr %s302, 2
          %s304 = smul.addr %s303, 8
          %s305 = scalar_lea.vmem %s2, %s304
        $region48: #{tpu_custom_call.1} parent=35 // pred_fallthru
          _
      $region36: #{tpu_custom_call.1} parent=5 // pred_fallthru
        _
      %p306 = scmp.le.s32.totalorder 1, %s19
      %p307 = scmp.lt.s32.totalorder %s19, 3
      %p308 = pnand %p306, %p307
      %p309 = pneg %p308
      // Predicated region
      $region49: #{tpu_custom_call.1} parent=5 // pred_check
        _
      $region50: #{tpu_custom_call.1} parent=5 // pred_check_branch
        %311 = sbr.rel (%p308) target = $region52
      $region51: #{tpu_custom_call.1} parent=5 // pred_region
        %s312 = ssub.s32 %s19, 1
        // Predicated region
        $region53: #{tpu_custom_call.1} parent=51 // pred_check
          %p313 = pneg %p160
        $region54: #{tpu_custom_call.1} parent=51 // pred_check_branch
          %315 = sbr.rel (%p313) target = $region56
        $region55: #{tpu_custom_call.1} parent=51 // pred_region
          %317 = dma.done [#allocation3], 256
        $region56: #{tpu_custom_call.1} parent=51 // pred_fallthru
          _
        // Predicated region
        $region57: #{tpu_custom_call.1} parent=51 // pred_check
          %p318 = pneg %p181
        $region58: #{tpu_custom_call.1} parent=51 // pred_check_branch
          %320 = sbr.rel (%p318) target = $region60
        $region59: #{tpu_custom_call.1} parent=51 // pred_region
          %322 = dma.done [#allocation6], 256
        $region60: #{tpu_custom_call.1} parent=51 // pred_fallthru
          _
        %p323 = scmp.lt.s32.totalorder %s24, 1
        %s324 = scalar_select %p323, %s24, 1
        %s325 = smul.addr %s324, 2
        %s326 = smul.addr %s325, 8
        %s327 = scalar_lea.vmem %s0, %s326
        %p328 = pneg %p45
        %p329 = pneg %p42
        %p330 = scmp.lt.s32.totalorder %s24, 1
        %s331 = scalar_select %p330, %s24, 1
        %s332 = scalar_lea.vmem %s1, %s331
        %p333 = pneg %p71
        %p334 = pneg %p68
        %p335 = scmp.lt.s32.totalorder %s24, 1
        %s336 = scalar_select %p335, %s24, 1
        %s337 = smul.addr %s336, 2
        %s338 = smul.addr %s337, 8
        %s339 = scalar_lea.vmem %s2, %s338
        %p340 = pneg %p97
        %p341 = pneg %p94
        %p342 = pneg %p118
        %p343 = pneg %p115
        %p344 = pneg %p139
        %p345 = pneg %p136
        %p346 = pneg %p160
        %p347 = pneg %p157
        %p348 = pneg %p181
        %p349 = pneg %p178
        %p350 = pneg %p202
        %p351 = pneg %p199
        %p352 = pneg %p228
        %p353 = pneg %p225
        %s354 = sand.u32 %s215, 1
        %s355 = scalar_lea.sflag [#allocation4], %s354
        %s356 = sand.u32 %s215, 1
        %s357 = smul.addr %s356, 16
        %s358 = scalar_lea.vmem [#allocation7], %s357
        %p359 = scmp.lt.s32.totalorder %s24, 1
        %s360 = scalar_select %p359, %s24, 1
        %s361 = smul.addr %s360, 2
        %s362 = smul.addr %s361, 8
        %s363 = scalar_lea.vmem %s0, %s362
        %p364 = scmp.lt.s32.totalorder %s24, 1
        %s365 = scalar_select %p364, %s24, 1
        %s366 = scalar_lea.vmem %s1, %s365
        %p367 = scmp.lt.s32.totalorder %s24, 1
        %s368 = scalar_select %p367, %s24, 1
        %s369 = smul.addr %s368, 2
        %s370 = smul.addr %s369, 8
        %s371 = scalar_lea.vmem %s2, %s370
        %v373 = vld [vmem:[%s363] sm:$0xff]
        %v374 = vld [vmem:[%s363 + $0x8] sm:$0xff]
        %vm375 = vcmask 261120
        %v376 = vsel %vm375, %v373, 0.0
        %377 = vadd.xlane.f32.xlu0 %v376
        %v378 = vpop.xlane.xlu0 %377
        %v379 = vsel %vm375, %v374, 0.0
        %380 = vadd.xlane.f32.xlu0 %v379
        %v381 = vpop.xlane.xlu0 %380
        %v382 = vrcp.pop 32.0
        %v383 = vmul.f32 32.0, %v382
        %v384 = vsub.f32 1.0, %v383
        %v385 = vmul.f32 %v382, %v384
        %v386 = vadd.f32 %v382, %v385
        %vm387 = vweird.f32 %v382
        %v388 = vsel %vm387, %v382, %v386
        %v389 = vmul.f32 %v378, %v388
        %v390 = vmul.f32 %v381, %v388
        %v391 = vsub.f32 %v373, %v389
        %v392 = vsub.f32 %v374, %v390
        %v393 = vmul.f32 %v391, %v391
        %v394 = vmul.f32 %v392, %v392
        %v395 = vsel %vm375, %v393, 0.0
        %396 = vadd.xlane.f32.xlu0 %v395
        %v397 = vpop.xlane.xlu0 %396
        %v398 = vsel %vm375, %v394, 0.0
        %399 = vadd.xlane.f32.xlu0 %v398
        %v400 = vpop.xlane.xlu0 %399
        %v401 = vmul.f32 %v397, %v388
        %v402 = vmul.f32 %v400, %v388
        %v403 = vadd.f32 %v401, 1e-05
        %v404 = vadd.f32 %v402, 1e-05
        %v405 = vrsqrt.pop %v403
        %v406 = vmul.f32 %v405, %v403
        %v407 = vmul.f32 %v406, %v405
        %v408 = vmul.f32 0.5, %v407
        %v409 = vsub.f32 1.5, %v408
        %v410 = vmul.f32 %v405, %v409
        %vm411 = vweird.f32 %v403
        %vm412 = vweird.f32 %v405
        %vm413 = vmor %vm411, %vm412
        %v414 = vsel %vm413, %v405, %v410
        %v415 = vrsqrt.pop %v404
        %v416 = vmul.f32 %v415, %v404
        %v417 = vmul.f32 %v416, %v415
        %v418 = vmul.f32 0.5, %v417
        %v419 = vsub.f32 1.5, %v418
        %v420 = vmul.f32 %v415, %v419
        %vm421 = vweird.f32 %v404
        %vm422 = vweird.f32 %v415
        %vm423 = vmor %vm421, %vm422
        %v424 = vsel %vm423, %v415, %v420
        %v425 = vmul.f32 %v391, %v414
        %v426 = vmul.f32 %v392, %v424
        %v427 = vld [vmem:[%s3] sm:$0x1]
        %v429 = vperm.slane %v427, 0
        %v431 = vmul.f32 %v425, %v429
        %v432 = vmul.f32 %v426, %v429
        %v433 = vld [vmem:[%s4] sm:$0x1]
        %v435 = vperm.slane %v433, 0
        %v437 = vadd.f32 %v431, %v435
        %v438 = vadd.f32 %v432, %v435
        %v439 = vpack.c.bf16 %v438, %v437
        %v440 = vld [vmem:[#allocation2] sm:$0xf]
        %v441 = vld [vmem:[#allocation2 + $0x4] sm:$0xf]
        %v442 = vld [vmem:[#allocation2 + $0x8] sm:$0xf]
        %v443 = vld [vmem:[#allocation2 + $0xc] sm:$0xf]
        %v448 = vunpack.c.l.b16 %v440
        %v449 = vunpack.c.l.b16 %v441
        %v450 = vunpack.c.l.b16 %v442
        %v451 = vunpack.c.l.b16 %v443
        %v452 = vpack.c.b16 %v449, %v448
        %v453 = vpack.c.b16 %v451, %v450
        %v457 = vsel %vm375, %v439, 0
        %459 = vmatpush.bf16.msra.mxu0 0
        %460 = vmatpush.bf16.msra.mxu0 0
        %461 = vmatpush.bf16.msra.mxu0 0
        %462 = vmatpush.bf16.msra.mxu0 0
        %463 = vmatpush.bf16.msra.mxu0 0
        %464 = vmatpush.bf16.msra.mxu0 0
        %465 = vmatpush.bf16.msra.mxu0 %v453
        %466 = vmatpush.bf16.msra.mxu0 %v452
        %467 = vmatmul.bf16.gmra.mxu0 %v457
        %v468 = vpop.f32.mrf.mxu0
        %v469 = vadd.f32 0.0, %v468
        %v470 = vpop.f32.mrf.mxu0
        %v471 = vadd.f32 0.0, %v470
        %472 = vdwg.mxu0
        %v473 = vpack.c.bf16 %v469, %v469
        %v474 = vpack.c.bf16 %v471, %v471
        %v475 = vld [vmem:[%s371] sm:$0xff]
        %v476 = vld [vmem:[%s371 + $0x8] sm:$0xff]
        %v477 = vld [vmem:[%s366] sm:$0x1]
        %479 = vset.pattern.permute.xlu0 0
        %480 = vperm.xlu0 %479, %v475
        %v481 = vpop.permute.xlu0 %480
        %484 = vset.pattern.permute.xlu0 0
        %485 = vperm.xlu0 %484, %v476
        %v486 = vpop.permute.xlu0 %485
        %v489 = vperm.slane %v477, 0
        %v491 = vmul.f32 %v481, %v489
        %v492 = vmul.f32 %v486, %v489
        %vm493 = vcmp.gt.f32.partialorder %v491, 0.5
        %vm494 = vcmp.gt.f32.partialorder %v492, 0.5
        %v495 = vsel %vm493, 0.0, -3.4028235e+38
        %v496 = vsel %vm494, 0.0, -3.4028235e+38
        %v499 = vunpack.c.l.b16 %v473
        %v500 = vunpack.c.l.b16 %v474
        %v501 = vpack.c.b16 %v500, %v499
        %502 = vrot.lane.b32.xlu0 %v501, 96
        %v503 = vpop.permute.xlu0 %502
        %vm504 = vcmask 64512
        %v506 = vsel %vm504, %v501, 0
        %v509 = vsel %vm504, %v503, 0
        %511 = vmatpush.bf16.xpose.msra.mxu0 0
        %512 = vmatpush.bf16.xpose.msra.mxu0 0
        %513 = vmatpush.bf16.xpose.msra.mxu0 0
        %514 = vmatpush.bf16.xpose.msra.mxu0 0
        %515 = vmatpush.bf16.xpose.msra.mxu0 0
        %516 = vmatpush.bf16.xpose.msra.mxu0 0
        %517 = vmatpush.bf16.xpose.msra.mxu0 0
        %518 = vmatpush.bf16.xpose.msra.mxu0 %v509
        %519 = vmatmul.bf16.gmra.mxu0 %v506
        %v520 = vpop.f32.mrf.mxu0
        %v521 = vadd.f32 %v495, %v520
        %v522 = vpop.f32.mrf.mxu0
        %v523 = vadd.f32 %v496, %v522
        %524 = vdwg.mxu0
        %vm525 = vcmask 130048
        %v526 = vsel %vm525, %v521, -inf
        %527 = vmax.xlane.f32.xlu0 %v526
        %v528 = vpop.xlane.xlu0 %527
        %v529 = vsel %vm525, %v523, -inf
        %530 = vmax.xlane.f32.xlu0 %v529
        %v531 = vpop.xlane.xlu0 %530
        %v532 = vsub.f32 %v521, %v528
        %v533 = vsub.f32 %v523, %v531
        %v534 = vmul.f32 %v532, 1.442695
        %v535 = vpow.pop %v534
        %v536 = vmul.f32 %v533, 1.442695
        %v537 = vpow.pop %v536
        %v538 = vsel %vm525, %v535, 0.0
        %539 = vadd.xlane.f32.xlu0 %v538
        %v540 = vpop.xlane.xlu0 %539
        %v541 = vsel %vm525, %v537, 0.0
        %542 = vadd.xlane.f32.xlu0 %v541
        %v543 = vpop.xlane.xlu0 %542
        %v544 = vrcp.pop %v540
        %v545 = vrcp.pop %v543
        %v546 = vmul.f32 %v535, %v544
        %v547 = vmul.f32 %v537, %v545
        %v548 = vpack.c.bf16 %v547, %v546
        %549 = vrot.lane.b32.xlu0 %v501, 64
        %v550 = vpop.permute.xlu0 %549
        %v553 = vsel %vm525, %v548, 0
        %555 = vmatpush.bf16.msra.mxu0 0
        %556 = vmatpush.bf16.msra.mxu0 0
        %557 = vmatpush.bf16.msra.mxu0 0
        %558 = vmatpush.bf16.msra.mxu0 0
        %559 = vmatpush.bf16.msra.mxu0 0
        %560 = vmatpush.bf16.msra.mxu0 0
        %561 = vmatpush.bf16.msra.mxu0 0
        %562 = vmatpush.bf16.msra.mxu0 %v550
        %563 = vmatmul.bf16.gmra.mxu0 %v553
        %v564 = vpop.f32.mrf.mxu0
        %v565 = vadd.f32 0.0, %v564
        %v566 = vpop.f32.mrf.mxu0
        %v567 = vadd.f32 0.0, %v566
        %568 = vdwg.mxu0
        %v569 = vpack.c.bf16 %v565, %v565
        %v570 = vpack.c.bf16 %v567, %v567
        %571 = vrot.lane.b32.xlu0 %v501, 120
        %v572 = vpop.permute.xlu0 %571
        %573 = vrot.lane.b32.xlu0 %v501, 88
        %v574 = vpop.permute.xlu0 %573
        %v576 = vsel %vm504, %v572, 0
        %v579 = vsel %vm504, %v574, 0
        %581 = vmatpush.bf16.xpose.msra.mxu0 0
        %582 = vmatpush.bf16.xpose.msra.mxu0 0
        %583 = vmatpush.bf16.xpose.msra.mxu0 0
        %584 = vmatpush.bf16.xpose.msra.mxu0 0
        %585 = vmatpush.bf16.xpose.msra.mxu0 0
        %586 = vmatpush.bf16.xpose.msra.mxu0 0
        %587 = vmatpush.bf16.xpose.msra.mxu0 0
        %588 = vmatpush.bf16.xpose.msra.mxu0 %v579
        %589 = vmatmul.bf16.gmra.mxu0 %v576
        %v590 = vpop.f32.mrf.mxu0
        %v591 = vadd.f32 %v495, %v590
        %v592 = vpop.f32.mrf.mxu0
        %v593 = vadd.f32 %v496, %v592
        %594 = vdwg.mxu0
        %v595 = vsel %vm525, %v591, -inf
        %596 = vmax.xlane.f32.xlu0 %v595
        %v597 = vpop.xlane.xlu0 %596
        %v598 = vsel %vm525, %v593, -inf
        %599 = vmax.xlane.f32.xlu0 %v598
        %v600 = vpop.xlane.xlu0 %599
        %v601 = vsub.f32 %v591, %v597
        %v602 = vsub.f32 %v593, %v600
        %v603 = vmul.f32 %v601, 1.442695
        %v604 = vpow.pop %v603
        %v605 = vmul.f32 %v602, 1.442695
        %v606 = vpow.pop %v605
        %v607 = vsel %vm525, %v604, 0.0
        %608 = vadd.xlane.f32.xlu0 %v607
        %v609 = vpop.xlane.xlu0 %608
        %v610 = vsel %vm525, %v606, 0.0
        %611 = vadd.xlane.f32.xlu0 %v610
        %v612 = vpop.xlane.xlu0 %611
        %v613 = vrcp.pop %v609
        %v614 = vrcp.pop %v612
        %v615 = vmul.f32 %v604, %v613
        %v616 = vmul.f32 %v606, %v614
        %v617 = vpack.c.bf16 %v616, %v615
        %618 = vrot.lane.b32.xlu0 %v501, 56
        %v619 = vpop.permute.xlu0 %618
        %v622 = vsel %vm525, %v617, 0
        %624 = vmatpush.bf16.msra.mxu0 0
        %625 = vmatpush.bf16.msra.mxu0 0
        %626 = vmatpush.bf16.msra.mxu0 0
        %627 = vmatpush.bf16.msra.mxu0 0
        %628 = vmatpush.bf16.msra.mxu0 0
        %629 = vmatpush.bf16.msra.mxu0 0
        %630 = vmatpush.bf16.msra.mxu0 0
        %631 = vmatpush.bf16.msra.mxu0 %v619
        %632 = vmatmul.bf16.gmra.mxu0 %v622
        %v633 = vpop.f32.mrf.mxu0
        %v634 = vadd.f32 0.0, %v633
        %v635 = vpop.f32.mrf.mxu0
        %v636 = vadd.f32 0.0, %v635
        %637 = vdwg.mxu0
        %v638 = vpack.c.bf16 %v634, %v634
        %v639 = vpack.c.bf16 %v636, %v636
        %640 = vrot.lane.b32.xlu0 %v501, 112
        %v641 = vpop.permute.xlu0 %640
        %642 = vrot.lane.b32.xlu0 %v501, 80
        %v643 = vpop.permute.xlu0 %642
        %v645 = vsel %vm504, %v641, 0
        %v648 = vsel %vm504, %v643, 0
        %650 = vmatpush.bf16.xpose.msra.mxu0 0
        %651 = vmatpush.bf16.xpose.msra.mxu0 0
        %652 = vmatpush.bf16.xpose.msra.mxu0 0
        %653 = vmatpush.bf16.xpose.msra.mxu0 0
        %654 = vmatpush.bf16.xpose.msra.mxu0 0
        %655 = vmatpush.bf16.xpose.msra.mxu0 0
        %656 = vmatpush.bf16.xpose.msra.mxu0 0
        %657 = vmatpush.bf16.xpose.msra.mxu0 %v648
        %658 = vmatmul.bf16.gmra.mxu0 %v645
        %v659 = vpop.f32.mrf.mxu0
        %v660 = vadd.f32 %v495, %v659
        %v661 = vpop.f32.mrf.mxu0
        %v662 = vadd.f32 %v496, %v661
        %663 = vdwg.mxu0
        %v664 = vsel %vm525, %v660, -inf
        %665 = vmax.xlane.f32.xlu0 %v664
        %v666 = vpop.xlane.xlu0 %665
        %v667 = vsel %vm525, %v662, -inf
        %668 = vmax.xlane.f32.xlu0 %v667
        %v669 = vpop.xlane.xlu0 %668
        %v670 = vsub.f32 %v660, %v666
        %v671 = vsub.f32 %v662, %v669
        %v672 = vmul.f32 %v670, 1.442695
        %v673 = vpow.pop %v672
        %v674 = vmul.f32 %v671, 1.442695
        %v675 = vpow.pop %v674
        %v676 = vsel %vm525, %v673, 0.0
        %677 = vadd.xlane.f32.xlu0 %v676
        %v678 = vpop.xlane.xlu0 %677
        %v679 = vsel %vm525, %v675, 0.0
        %680 = vadd.xlane.f32.xlu0 %v679
        %v681 = vpop.xlane.xlu0 %680
        %v682 = vrcp.pop %v678
        %v683 = vrcp.pop %v681
        %v684 = vmul.f32 %v673, %v682
        %v685 = vmul.f32 %v675, %v683
        %v686 = vpack.c.bf16 %v685, %v684
        %687 = vrot.lane.b32.xlu0 %v501, 48
        %v688 = vpop.permute.xlu0 %687
        %v691 = vsel %vm525, %v686, 0
        %693 = vmatpush.bf16.msra.mxu0 0
        %694 = vmatpush.bf16.msra.mxu0 0
        %695 = vmatpush.bf16.msra.mxu0 0
        %696 = vmatpush.bf16.msra.mxu0 0
        %697 = vmatpush.bf16.msra.mxu0 0
        %698 = vmatpush.bf16.msra.mxu0 0
        %699 = vmatpush.bf16.msra.mxu0 0
        %700 = vmatpush.bf16.msra.mxu0 %v688
        %701 = vmatmul.bf16.gmra.mxu0 %v691
        %v702 = vpop.f32.mrf.mxu0
        %v703 = vadd.f32 0.0, %v702
        %v704 = vpop.f32.mrf.mxu0
        %v705 = vadd.f32 0.0, %v704
        %706 = vdwg.mxu0
        %v707 = vpack.c.bf16 %v703, %v703
        %v708 = vpack.c.bf16 %v705, %v705
        %709 = vrot.lane.b32.xlu0 %v501, 104
        %v710 = vpop.permute.xlu0 %709
        %711 = vrot.lane.b32.xlu0 %v501, 72
        %v712 = vpop.permute.xlu0 %711
        %v714 = vsel %vm504, %v710, 0
        %v717 = vsel %vm504, %v712, 0
        %719 = vmatpush.bf16.xpose.msra.mxu0 0
        %720 = vmatpush.bf16.xpose.msra.mxu0 0
        %721 = vmatpush.bf16.xpose.msra.mxu0 0
        %722 = vmatpush.bf16.xpose.msra.mxu0 0
        %723 = vmatpush.bf16.xpose.msra.mxu0 0
        %724 = vmatpush.bf16.xpose.msra.mxu0 0
        %725 = vmatpush.bf16.xpose.msra.mxu0 0
        %726 = vmatpush.bf16.xpose.msra.mxu0 %v717
        %727 = vmatmul.bf16.gmra.mxu0 %v714
        %v728 = vpop.f32.mrf.mxu0
        %v729 = vadd.f32 %v495, %v728
        %v730 = vpop.f32.mrf.mxu0
        %v731 = vadd.f32 %v496, %v730
        %732 = vdwg.mxu0
        %v733 = vsel %vm525, %v729, -inf
        %734 = vmax.xlane.f32.xlu0 %v733
        %v735 = vpop.xlane.xlu0 %734
        %v736 = vsel %vm525, %v731, -inf
        %737 = vmax.xlane.f32.xlu0 %v736
        %v738 = vpop.xlane.xlu0 %737
        %v739 = vsub.f32 %v729, %v735
        %v740 = vsub.f32 %v731, %v738
        %v741 = vmul.f32 %v739, 1.442695
        %v742 = vpow.pop %v741
        %v743 = vmul.f32 %v740, 1.442695
        %v744 = vpow.pop %v743
        %v745 = vsel %vm525, %v742, 0.0
        %746 = vadd.xlane.f32.xlu0 %v745
        %v747 = vpop.xlane.xlu0 %746
        %v748 = vsel %vm525, %v744, 0.0
        %749 = vadd.xlane.f32.xlu0 %v748
        %v750 = vpop.xlane.xlu0 %749
        %v751 = vrcp.pop %v747
        %v752 = vrcp.pop %v750
        %v753 = vmul.f32 %v742, %v751
        %v754 = vmul.f32 %v744, %v752
        %v755 = vpack.c.bf16 %v754, %v753
        %756 = vrot.lane.b32.xlu0 %v501, 40
        %v757 = vpop.permute.xlu0 %756
        %v760 = vsel %vm525, %v755, 0
        %762 = vmatpush.bf16.msra.mxu0 0
        %763 = vmatpush.bf16.msra.mxu0 0
        %764 = vmatpush.bf16.msra.mxu0 0
        %765 = vmatpush.bf16.msra.mxu0 0
        %766 = vmatpush.bf16.msra.mxu0 0
        %767 = vmatpush.bf16.msra.mxu0 0
        %768 = vmatpush.bf16.msra.mxu0 0
        %769 = vmatpush.bf16.msra.mxu0 %v757
        %770 = vmatmul.bf16.gmra.mxu0 %v760
        %v771 = vpop.f32.mrf.mxu0
        %v772 = vadd.f32 0.0, %v771
        %v773 = vpop.f32.mrf.mxu0
        %v774 = vadd.f32 0.0, %v773
        %775 = vdwg.mxu0
        %v776 = vpack.c.bf16 %v772, %v772
        %v777 = vpack.c.bf16 %v774, %v774
        %v780 = vunpack.c.l.b16 %v569
        %v781 = vunpack.c.l.b16 %v570
        %v782 = vpack.c.b16 %v781, %v780
        %v785 = vunpack.c.l.b16 %v638
        %v786 = vunpack.c.l.b16 %v639
        %v787 = vpack.c.b16 %v786, %v785
        %788 = vrot.lane.b32.xlu0 %v787, 8
        %v789 = vpop.permute.xlu0 %788
        %v792 = vunpack.c.l.b16 %v707
        %v793 = vunpack.c.l.b16 %v708
        %v794 = vpack.c.b16 %v793, %v792
        %795 = vrot.lane.b32.xlu0 %v794, 16
        %v796 = vpop.permute.xlu0 %795
        %v799 = vunpack.c.l.b16 %v776
        %v800 = vunpack.c.l.b16 %v777
        %v801 = vpack.c.b16 %v800, %v799
        %802 = vrot.lane.b32.xlu0 %v801, 24
        %v803 = vpop.permute.xlu0 %802
        %v806 = vsel %vm504, %v782, %v789
        %v808 = vsel %vm525, %v806, %v796
        %vm809 = vcmask 195584
        %v811 = vsel %vm809, %v808, %v803
        %v812 = vld [vmem:[#allocation5] sm:$0xf]
        %v813 = vld [vmem:[#allocation5 + $0x4] sm:$0xf]
        %v814 = vld [vmem:[#allocation5 + $0x8] sm:$0xf]
        %v815 = vld [vmem:[#allocation5 + $0xc] sm:$0xf]
        %v816 = vld [vmem:[%s7] sm:$0x1]
        %v818 = vperm.slane %v816, 0
        %v824 = vunpack.c.l.b16 %v812
        %v825 = vunpack.c.l.b16 %v813
        %v826 = vunpack.c.l.b16 %v814
        %v827 = vunpack.c.l.b16 %v815
        %v828 = vpack.c.b16 %v825, %v824
        %v829 = vpack.c.b16 %v827, %v826
        %v832 = vsel %vm375, %v811, 0
        %834 = vmatpush.bf16.msra.mxu0 0
        %835 = vmatpush.bf16.msra.mxu0 0
        %836 = vmatpush.bf16.msra.mxu0 0
        %837 = vmatpush.bf16.msra.mxu0 0
        %838 = vmatpush.bf16.msra.mxu0 0
        %839 = vmatpush.bf16.msra.mxu0 0
        %840 = vmatpush.bf16.msra.mxu0 %v829
        %841 = vmatpush.bf16.msra.mxu0 %v828
        %842 = vmatmul.bf16.gmra.mxu0 %v832
        %v843 = vpop.f32.mrf.mxu0
        %v844 = vadd.f32 %v818, %v843
        %v845 = vpop.f32.mrf.mxu0
        %v846 = vadd.f32 %v818, %v845
        %847 = vdwg.mxu0
        %848 = vst.msk [vmem:[%s358] sm:$0xff] %vm375, %v844
        %849 = vst.msk [vmem:[%s358 + $0x8] sm:$0xff] %vm375, %v846
        %s850 = sand.u32 %s215, 1
        %s851 = scalar_lea.sflag [#allocation4], %s850
        %s852 = sand.u32 %s215, 1
        %s853 = smul.addr %s852, 16
        %s854 = scalar_lea.vmem [#allocation7], %s853
        // Predicated region
        $region61: #{tpu_custom_call.1} parent=51 // pred_check
          %p855 = pneg %p225
        $region62: #{tpu_custom_call.1} parent=51 // pred_check_branch
          %857 = sbr.rel (%p855) target = $region64
        $region63: #{tpu_custom_call.1} parent=51 // pred_region
          %859 = vsyncadd %s851, 0
          %s860 = smul.addr %s24, 2
          %s861 = smul.addr %s860, 8
          %s862 = scalar_lea.hbm %s8, %s861
          %s863 = sshll.u32 %s854, 4
          %s864 = int_to_ptr.vmem [resolvable:$true] %s863
          %s865 = sshll.u32 %s862, 4
          %s866 = int_to_ptr.hbm [resolvable:$true] %s865
          %871 = dma.vmem_to_hbm [thread:$0]  %s864, 256, %s866, %s851, 128, 128, 8
        $region64: #{tpu_custom_call.1} parent=51 // pred_fallthru
          _
      $region52: #{tpu_custom_call.1} parent=5 // pred_fallthru
        _
      %p872 = scmp.le.s32.totalorder 2, %s19
      // Predicated region
      $region65: #{tpu_custom_call.1} parent=5 // pred_check
        %p873 = pneg %p872
      $region66: #{tpu_custom_call.1} parent=5 // pred_check_branch
        %875 = sbr.rel (%p873) target = $region68
      $region67: #{tpu_custom_call.1} parent=5 // pred_region
        %s876 = ssub.s32 %s19, 2
        // Predicated region
        $region69: #{tpu_custom_call.1} parent=67 // pred_check
          %p877 = pneg %p231
        $region70: #{tpu_custom_call.1} parent=67 // pred_check_branch
          %879 = sbr.rel (%p877) target = $region72
        $region71: #{tpu_custom_call.1} parent=67 // pred_region
          %s880 = sand.u32 %s216, 1
          %s881 = scalar_lea.sflag [#allocation4], %s880
          %s882 = sand.u32 %s216, 1
          %s883 = smul.addr %s882, 16
          %s884 = scalar_lea.vmem [#allocation7], %s883
          %886 = dma.done %s881, 256
        $region72: #{tpu_custom_call.1} parent=67 // pred_fallthru
          _
      $region68: #{tpu_custom_call.1} parent=5 // pred_fallthru
        _
    $region6: #{tpu_custom_call.1} parent=1 // loop_footer
      %s23 = sadd.s32 1, %s19
    $region7: #{tpu_custom_call.1} parent=1 // loop_footer_branch
      %18 = sbr.rel target = $region3
    $region8: #{tpu_custom_call.1} parent=1 // loop_exit
      _
    %887 = vsyncpa [#allocation3], 1
    %s888 = scalar_lea.sflag [#allocation3], 1
    %889 = vsyncpa %s888, 1
    %890 = vsyncpa [#allocation6], 1
    %891 = vsyncpa [#allocation4], 1
    %s892 = scalar_lea.sflag [#allocation4], 1
    %893 = vsyncpa %s892, 1

</llo_original>
